<compile_context>
chip_gen: v7x
topology: tpu7x:2x2x1
jax: 0.10.0
libtpu: 0.0.40
codegen_flags: <defaults>
</compile_context>

<pallas_src>
import jax
import jax.numpy as jnp
from jax import lax
from jax.experimental import pallas as pl
from jax.experimental.pallas import tpu as pltpu

_LANE = 128
_SUBLANE = 8
_CHUNK_ROWS = 512  # rows of activations kept live per inner step (bounds vreg pressure)


def _round_up(n, m):
    return ((n + m - 1) // m) * m


def _make_mlp_kernel(num_layers, n_chunks, chunk_rows):
    """Fused MLP kernel: (x_ref, w1, b1, ..., wL, bL, o_ref).

    ReLU after every layer except the last; dropout (eval mode) is identity.
    Processes the (tb, in) VMEM tile in `n_chunks` sub-blocks of `chunk_rows`
    rows each to keep the live activation slab inside the vreg file.
    """

    def kernel(x_ref, *refs):
        o_ref = refs[-1]
        wb = refs[:-1]

        def compute(r0):
            h = x_ref[pl.ds(r0, chunk_rows), :]
            for i in range(num_layers):
                w = wb[2 * i][...]
                b = wb[2 * i + 1][...]          # (1, out) -> broadcasts over rows
                h = jnp.dot(h, w, preferred_element_type=jnp.float32) + b
                if i < num_layers - 1:
                    h = jnp.maximum(h, 0.0)     # ReLU on hidden layers only
            o_ref[pl.ds(r0, chunk_rows), :] = h.astype(o_ref.dtype)

        if n_chunks == 1:
            compute(0)
        else:
            def body(c, carry):
                compute(pl.multiple_of(c * chunk_rows, chunk_rows))
                return carry
            lax.fori_loop(0, n_chunks, body, None, unroll=True)

    return kernel


def mlp_forward(x, params, *, tile_b=2048):
    """x: [B, input_dim] f32.  params: (w1, b1, ..., wL, bL), w: [in, out], b: [1, out]."""
    B, in_dim = x.shape
    num_layers = len(params) // 2
    out_dim = params[-2].shape[1]
    out_pad = _round_up(out_dim, _LANE)  # lane-dense output slab (unmasked vst)

    # Pad final layer weight/bias to 128 output columns (zeros), slice after call.
    params = list(params)
    if out_pad != out_dim:
        params[-2] = jnp.pad(params[-2], ((0, 0), (0, out_pad - out_dim)))
        params[-1] = jnp.pad(params[-1], ((0, 0), (0, out_pad - out_dim)))

    # Batch tile: large (amortizes per-step overhead), whole number of inner chunks.
    tile_b = max(_CHUNK_ROWS, _round_up(tile_b, _CHUNK_ROWS))
    if B <= _CHUNK_ROWS:
        tb = _round_up(B, _SUBLANE)
        chunk_rows, n_chunks = tb, 1
    else:
        tb = min(tile_b, _round_up(B, _CHUNK_ROWS))
        chunk_rows, n_chunks = _CHUNK_ROWS, tb // _CHUNK_ROWS

    # No jnp.pad of x: ragged last block handled by Pallas (unwritten rows dropped).
    grid = (pl.cdiv(B, tb),)

    x_spec = pl.BlockSpec((tb, in_dim), lambda i: (i, 0))
    out_spec = pl.BlockSpec((tb, out_pad), lambda i: (i, 0))
    # Weights / biases: full-array blocks, constant index_map -> VMEM-resident
    # across all batch-tile steps (no re-DMA per step).
    const = lambda a: pl.BlockSpec(a.shape, lambda i: tuple(0 for _ in a.shape))
    in_specs = [x_spec] + [const(p) for p in params]

    out = pl.pallas_call(
        _make_mlp_kernel(num_layers, n_chunks, chunk_rows),
        out_shape=jax.ShapeDtypeStruct((B, out_pad), jnp.float32),
        grid=grid,
        in_specs=in_specs,
        out_specs=out_spec,
        compiler_params=pltpu.CompilerParams(
            dimension_semantics=("parallel",),
        ),
    )(x, *params)

    return out[:, :out_dim] if out_pad != out_dim else out


def init_params(key, input_dim, layer_dims, output_dim=4):
    """Deterministic init mimicking nn.Linear's uniform(-1/sqrt(fan_in), 1/sqrt(fan_in))."""
    dims = [input_dim] + list(layer_dims) + [output_dim]
    params = []
    for i in range(len(dims) - 1):
        fan_in, fan_out = dims[i], dims[i + 1]
        key, kw, kb = jax.random.split(key, 3)
        bound = 1.0 / jnp.sqrt(fan_in)
        w = jax.random.uniform(kw, (fan_in, fan_out), jnp.float32, -bound, bound)
        b = jax.random.uniform(kb, (1, fan_out), jnp.float32, -bound, bound)
        params += [w, b]
    return tuple(params)


def reference_forward(x, params):
    num_layers = len(params) // 2
    h = x
    for i in range(num_layers):
        w, b = params[2 * i], params[2 * i + 1]
        h = h @ w + b
        if i < num_layers - 1:
            h = jnp.maximum(h, 0.0)
    return h


if __name__ == "__main__":
    # Small shapes consistent with the module's forward.
    batch = 8
    input_dim = 32
    layer_dims = [64, 32]
    output_dim = 4
    dropout = 0.5  # identity in eval mode

    key = jax.random.PRNGKey(0)
    kx, kp, kx2, kx3 = jax.random.split(key, 4)
    x = jax.random.normal(kx, (batch, input_dim), jnp.float32)
    params = init_params(kp, input_dim, layer_dims, output_dim)

    # 1) Tiny batch: single grid step, single chunk.
    out = jax.block_until_ready(mlp_forward(x, params))
    ref = reference_forward(x, params)
    assert out.shape == (batch, output_dim), out.shape
    assert jnp.allclose(out, ref, atol=1e-4, rtol=1e-4), "mismatch vs JAX reference"

    # 2) Non-multiple-of-8 batch (ragged block, no pad copy).
    x2 = jax.random.normal(kx2, (300, input_dim), jnp.float32)
    out2 = jax.block_until_ready(mlp_forward(x2, params))
    ref2 = reference_forward(x2, params)
    assert out2.shape == (300, output_dim), out2.shape
    assert jnp.allclose(out2, ref2, atol=1e-4, rtol=1e-4), "mismatch (ragged path)"

    # 3) Multi-grid-step path (grid=3, ragged last block).
    x3 = jax.random.normal(kx3, (1200, input_dim), jnp.float32)
    out3 = jax.block_until_ready(mlp_forward(x3, params, tile_b=512))
    ref3 = reference_forward(x3, params)
    assert out3.shape == (1200, output_dim), out3.shape
    assert jnp.allclose(out3, ref3, atol=1e-4, rtol=1e-4), "mismatch (multi-tile path)"

    # 4) Inner-chunk-loop path (one grid step, 3 x 512-row chunks).
    out4 = jax.block_until_ready(mlp_forward(x3, params, tile_b=2048))
    assert out4.shape == (1200, output_dim), out4.shape
    assert jnp.allclose(out4, ref3, atol=1e-4, rtol=1e-4), "mismatch (chunked path)"

    print("KERNEL_OK")
</pallas_src>

<mosaic_0001>
module attributes {stable_mosaic.version = 11 : i64} {
  func.func @kernel(%arg0: i32, %arg1: memref<8x32xf32, #tpu.memory_space<vmem>>, %arg2: memref<32x64xf32, #tpu.memory_space<vmem>>, %arg3: memref<1x64xf32, #tpu.memory_space<vmem>>, %arg4: memref<64x32xf32, #tpu.memory_space<vmem>>, %arg5: memref<1x32xf32, #tpu.memory_space<vmem>>, %arg6: memref<32x128xf32, #tpu.memory_space<vmem>>, %arg7: memref<1x128xf32, #tpu.memory_space<vmem>>, %arg8: memref<8x128xf32, #tpu.memory_space<vmem>>) attributes {dimension_semantics = [#tpu.dimension_semantics<parallel>], iteration_bounds = array<i64: 1>, scalar_prefetch = 0 : i64, scratch_operands = 0 : i64, tpu.core_type = #tpu.core_type<tc>, window_params = [{transform_indices = @transform_0, window_bounds = array<i64: 8, 32>}, {pipeline_mode = #tpu.pipeline_mode<synchronous>, transform_indices = @transform_1, window_bounds = array<i64: 32, 64>}, {pipeline_mode = #tpu.pipeline_mode<synchronous>, transform_indices = @transform_2, window_bounds = array<i64: 1, 64>}, {pipeline_mode = #tpu.pipeline_mode<synchronous>, transform_indices = @transform_3, window_bounds = array<i64: 64, 32>}, {pipeline_mode = #tpu.pipeline_mode<synchronous>, transform_indices = @transform_4, window_bounds = array<i64: 1, 32>}, {pipeline_mode = #tpu.pipeline_mode<synchronous>, transform_indices = @transform_5, window_bounds = array<i64: 32, 128>}, {pipeline_mode = #tpu.pipeline_mode<synchronous>, transform_indices = @transform_6, window_bounds = array<i64: 1, 128>}, {transform_indices = @transform_7, window_bounds = array<i64: 8, 128>}]} {
    %c0 = arith.constant 0 : index
    %c0_0 = arith.constant 0 : index
    %0 = vector.load %arg1[%c0, %c0_0] : memref<8x32xf32, #tpu.memory_space<vmem>>, vector<8x32xf32>
    %c0_1 = arith.constant 0 : index
    %c0_2 = arith.constant 0 : index
    %1 = vector.load %arg2[%c0_1, %c0_2] : memref<32x64xf32, #tpu.memory_space<vmem>>, vector<32x64xf32>
    %c0_3 = arith.constant 0 : index
    %c0_4 = arith.constant 0 : index
    %2 = vector.load %arg3[%c0_3, %c0_4] : memref<1x64xf32, #tpu.memory_space<vmem>>, vector<1x64xf32>
    %cst = arith.constant dense<0.000000e+00> : vector<8x64xf32>
    %3 = tpu.matmul %0, %1, %cst {dimension_numbers = #tpu.dot_dimension_numbers<[1], [0], [0], [1], [0, 0, 1, 1], [], []>} : vector<8x32xf32>, vector<32x64xf32>, vector<8x64xf32> -> vector<8x64xf32>
    %4 = vector.broadcast %2 : vector<1x64xf32> to vector<8x64xf32>
    %5 = arith.addf %3, %4 : vector<8x64xf32>
    %cst_5 = arith.constant 0.000000e+00 : f32
    %6 = vector.broadcast %cst_5 : f32 to vector<8x64xf32>
    %7 = arith.maximumf %5, %6 : vector<8x64xf32>
    %c0_6 = arith.constant 0 : index
    %c0_7 = arith.constant 0 : index
    %8 = vector.load %arg4[%c0_6, %c0_7] : memref<64x32xf32, #tpu.memory_space<vmem>>, vector<64x32xf32>
    %c0_8 = arith.constant 0 : index
    %c0_9 = arith.constant 0 : index
    %9 = vector.load %arg5[%c0_8, %c0_9] : memref<1x32xf32, #tpu.memory_space<vmem>>, vector<1x32xf32>
    %cst_10 = arith.constant dense<0.000000e+00> : vector<8x32xf32>
    %10 = tpu.matmul %7, %8, %cst_10 {dimension_numbers = #tpu.dot_dimension_numbers<[1], [0], [0], [1], [0, 0, 1, 1], [], []>} : vector<8x64xf32>, vector<64x32xf32>, vector<8x32xf32> -> vector<8x32xf32>
    %11 = vector.broadcast %9 : vector<1x32xf32> to vector<8x32xf32>
    %12 = arith.addf %10, %11 : vector<8x32xf32>
    %cst_11 = arith.constant 0.000000e+00 : f32
    %13 = vector.broadcast %cst_11 : f32 to vector<8x32xf32>
    %14 = arith.maximumf %12, %13 : vector<8x32xf32>
    %c0_12 = arith.constant 0 : index
    %c0_13 = arith.constant 0 : index
    %15 = vector.load %arg6[%c0_12, %c0_13] : memref<32x128xf32, #tpu.memory_space<vmem>>, vector<32x128xf32>
    %c0_14 = arith.constant 0 : index
    %c0_15 = arith.constant 0 : index
    %16 = vector.load %arg7[%c0_14, %c0_15] : memref<1x128xf32, #tpu.memory_space<vmem>>, vector<1x128xf32>
    %cst_16 = arith.constant dense<0.000000e+00> : vector<8x128xf32>
    %17 = tpu.matmul %14, %15, %cst_16 {dimension_numbers = #tpu.dot_dimension_numbers<[1], [0], [0], [1], [0, 0, 1, 1], [], []>} : vector<8x32xf32>, vector<32x128xf32>, vector<8x128xf32> -> vector<8x128xf32>
    %18 = vector.broadcast %16 : vector<1x128xf32> to vector<8x128xf32>
    %19 = arith.addf %17, %18 : vector<8x128xf32>
    %c0_17 = arith.constant 0 : index
    %c0_18 = arith.constant 0 : index
    %20 = vector.load %arg8[%c0_17, %c0_18] : memref<8x128xf32, #tpu.memory_space<vmem>>, vector<8x128xf32>
    tpu.vector_store %arg8[%c0_17, %c0_18], %19 {strides = array<i32>} : memref<8x128xf32, #tpu.memory_space<vmem>>, vector<8x128xf32>,
    return
  }
  func.func @transform_0(%arg0: i32) -> (i32, i32) {
    %c0_i32 = arith.constant 0 : i32
    %c0_i32_0 = arith.constant 0 : i32
    return %arg0, %c0_i32 : i32, i32
  }
  func.func @transform_1(%arg0: i32) -> (i32, i32) {
    %c0_i32 = arith.constant 0 : i32
    %c0_i32_0 = arith.constant 0 : i32
    %c0_i32_1 = arith.constant 0 : i32
    return %c0_i32, %c0_i32_0 : i32, i32
  }
  func.func @transform_2(%arg0: i32) -> (i32, i32) {
    %c0_i32 = arith.constant 0 : i32
    %c0_i32_0 = arith.constant 0 : i32
    %c0_i32_1 = arith.constant 0 : i32
    return %c0_i32, %c0_i32_0 : i32, i32
  }
  func.func @transform_3(%arg0: i32) -> (i32, i32) {
    %c0_i32 = arith.constant 0 : i32
    %c0_i32_0 = arith.constant 0 : i32
    %c0_i32_1 = arith.constant 0 : i32
    return %c0_i32, %c0_i32_0 : i32, i32
  }
  func.func @transform_4(%arg0: i32) -> (i32, i32) {
    %c0_i32 = arith.constant 0 : i32
    %c0_i32_0 = arith.constant 0 : i32
    %c0_i32_1 = arith.constant 0 : i32
    return %c0_i32, %c0_i32_0 : i32, i32
  }
  func.func @transform_5(%arg0: i32) -> (i32, i32) {
    %c0_i32 = arith.constant 0 : i32
    %c0_i32_0 = arith.constant 0 : i32
    %c0_i32_1 = arith.constant 0 : i32
    return %c0_i32, %c0_i32_0 : i32, i32
  }
  func.func @transform_6(%arg0: i32) -> (i32, i32) {
    %c0_i32 = arith.constant 0 : i32
    %c0_i32_0 = arith.constant 0 : i32
    %c0_i32_1 = arith.constant 0 : i32
    return %c0_i32, %c0_i32_0 : i32, i32
  }
  func.func @transform_7(%arg0: i32) -> (i32, i32) {
    %c0_i32 = arith.constant 0 : i32
    %c0_i32_0 = arith.constant 0 : i32
    return %arg0, %c0_i32 : i32, i32
  }
}

</mosaic_0001>

<llo_original>
// kernel: tpu_custom_call.1
$region0: #{tpu_custom_call.1}
  #allocation0 [shape = 'u32[]', space=smem, size = 0x4, offset = 0x4, fixed_abs, tag = 'smem constant byte address 0x4 - core index']
  #allocation1 [shape = 'u32[144,128]{1,0:T(1,128)}', space=vmem, size = 0x12000, scoped, tag = 'internal scratch']
  %s0 = inlined_call_operand.vmem [shape: f32[8,32], index: 0, kind: input, shape index: {}]
  %s1 = inlined_call_operand.vmem [shape: f32[32,64], index: 1, kind: input, shape index: {}]
  %s2 = inlined_call_operand.vmem [shape: f32[1,64], index: 2, kind: input, shape index: {}]
  %s3 = inlined_call_operand.vmem [shape: f32[64,32], index: 3, kind: input, shape index: {}]
  %s4 = inlined_call_operand.vmem [shape: f32[1,32], index: 4, kind: input, shape index: {}]
  %s5 = inlined_call_operand.vmem [shape: f32[32,128], index: 5, kind: input, shape index: {}]
  %s6 = inlined_call_operand.vmem [shape: f32[1,128], index: 6, kind: input, shape index: {}]
  %s7 = inlined_call_operand.hbm [shape: f32[8,128], index: 7, kind: output, shape index: {}]
  %s8 = sld [smem:[#allocation0]]
  $region38: #{tpu_custom_call.1} parent=0
    _
  %s10 = ssub.s32 1, %s8
  %s11 = scalar_select 0, %s10, %s8
  $region1: #{tpu_custom_call.1} parent=0
    #allocation2 [shape = 'u8[4096]{0}', space=vmem, size = 0x1000, scoped, tag = 'output window, operand 0, single buffered']
    #allocation3 [shape = 's32[1]{0}', space=sflag, size = 0x4, scoped, tag = 'scoped memory for tpu_custom_call.1']
    %12 = vsyncpa [#allocation3], 0
    // Predicated region
    $region2: #{tpu_custom_call.1} parent=1 // pred_check
      _
    $region3: #{tpu_custom_call.1} parent=1 // pred_check_branch
      %14 = sbr.rel (0) target = $region5
    $region4: #{tpu_custom_call.1} parent=1 // pred_region
      _
    $region5: #{tpu_custom_call.1} parent=1 // pred_fallthru
      _
    // Predicated region
    $region6: #{tpu_custom_call.1} parent=1 // pred_check
      _
    $region7: #{tpu_custom_call.1} parent=1 // pred_check_branch
      %16 = sbr.rel (0) target = $region9
    $region8: #{tpu_custom_call.1} parent=1 // pred_region
      _
    $region9: #{tpu_custom_call.1} parent=1 // pred_fallthru
      _
    // Predicated region
    $region10: #{tpu_custom_call.1} parent=1 // pred_check
      _
    $region11: #{tpu_custom_call.1} parent=1 // pred_check_branch
      %18 = sbr.rel (0) target = $region13
    $region12: #{tpu_custom_call.1} parent=1 // pred_region
      _
    $region13: #{tpu_custom_call.1} parent=1 // pred_fallthru
      _
    // Predicated region
    $region14: #{tpu_custom_call.1} parent=1 // pred_check
      _
    $region15: #{tpu_custom_call.1} parent=1 // pred_check_branch
      %20 = sbr.rel (0) target = $region17
    $region16: #{tpu_custom_call.1} parent=1 // pred_region
      _
    $region17: #{tpu_custom_call.1} parent=1 // pred_fallthru
      _
    // Predicated region
    $region18: #{tpu_custom_call.1} parent=1 // pred_check
      _
    $region19: #{tpu_custom_call.1} parent=1 // pred_check_branch
      %22 = sbr.rel (0) target = $region21
    $region20: #{tpu_custom_call.1} parent=1 // pred_region
      _
    $region21: #{tpu_custom_call.1} parent=1 // pred_fallthru
      _
    // Predicated region
    $region22: #{tpu_custom_call.1} parent=1 // pred_check
      _
    $region23: #{tpu_custom_call.1} parent=1 // pred_check_branch
      %24 = sbr.rel (0) target = $region25
    $region24: #{tpu_custom_call.1} parent=1 // pred_region
      _
    $region25: #{tpu_custom_call.1} parent=1 // pred_fallthru
      _
    // Predicated region
    $region26: #{tpu_custom_call.1} parent=1 // pred_check
      _
    $region27: #{tpu_custom_call.1} parent=1 // pred_check_branch
      %26 = sbr.rel (0) target = $region29
    $region28: #{tpu_custom_call.1} parent=1 // pred_region
      _
    $region29: #{tpu_custom_call.1} parent=1 // pred_fallthru
      _
    %v27 = vld [vmem:[%s0] sm:$0xff]
    %v28 = vld [vmem:[%s1] sm:$0xff]
    %v29 = vld [vmem:[%s1 + $0x8] sm:$0xff]
    %v30 = vld [vmem:[%s1 + $0x10] sm:$0xff]
    %v31 = vld [vmem:[%s1 + $0x18] sm:$0xff]
    %v32 = vld [vmem:[%s2] sm:$0x1]
    %v34 = vlaneseq
    %v35 = vshrl.u32 %v34, 7
    %v36 = vsub.s32 0, %v35
    %v37 = vrot.slane %v32, %v36
    %vm39 = vcmask 261120
    %v41 = vsel %vm39, %v27, 0
    %43 = vmatprep.subr.mxu0 0.0
    %44 = vmatpush1.msra.mxu0 %v28
    %45 = vmatprep.subr.mxu0 0.0
    %46 = vmatpush1.msra.mxu0 %v29
    %47 = vmatprep.subr.mxu0 0.0
    %48 = vmatpush1.msra.mxu0 %v30
    %49 = vmatprep.subr.mxu0 0.0
    %50 = vmatpush1.msra.mxu0 %v31
    %51 = vmatprep.subr.mxu0 0.0
    %52 = vmatpush1.msra.mxu0 0.0
    %53 = vmatprep.subr.mxu0 0.0
    %54 = vmatpush1.msra.mxu0 0.0
    %55 = vmatprep.subr.mxu0 0.0
    %56 = vmatpush1.msra.mxu0 0.0
    %57 = vmatprep.subr.mxu0 0.0
    %58 = vmatpush1.msra.mxu0 0.0
    %59 = vmatprep.subr.mxu0 0.0
    %60 = vmatpush1.msra.mxu0 0.0
    %61 = vmatprep.subr.mxu0 0.0
    %62 = vmatpush1.msra.mxu0 0.0
    %63 = vmatprep.subr.mxu0 0.0
    %64 = vmatpush1.msra.mxu0 0.0
    %65 = vmatprep.subr.mxu0 0.0
    %66 = vmatpush1.msra.mxu0 0.0
    %67 = vmatprep.subr.mxu0 0.0
    %68 = vmatpush1.msra.mxu0 0.0
    %69 = vmatprep.subr.mxu0 0.0
    %70 = vmatpush1.msra.mxu0 0.0
    %71 = vmatprep.subr.mxu0 0.0
    %72 = vmatpush1.msra.mxu0 0.0
    %73 = vmatprep.subr.mxu0 0.0
    %74 = vmatpush1.msra.mxu0 0.0
    %75 = vmatprep.subr.mxu0 0.0
    %76 = vmatpush1.msra.mxu0 0.0
    %77 = vmatprep.subr.mxu0 0.0
    %78 = vmatpush1.msra.mxu0 0.0
    %79 = vmatprep.subr.mxu0 0.0
    %80 = vmatpush1.msra.mxu0 0.0
    %81 = vmatprep.subr.mxu0 0.0
    %82 = vmatpush1.msra.mxu0 0.0
    %83 = vmatprep.subr.mxu0 0.0
    %84 = vmatpush1.msra.mxu0 0.0
    %85 = vmatprep.subr.mxu0 0.0
    %86 = vmatpush1.msra.mxu0 0.0
    %87 = vmatprep.subr.mxu0 0.0
    %88 = vmatpush1.msra.mxu0 0.0
    %89 = vmatprep.subr.mxu0 0.0
    %90 = vmatpush1.msra.mxu0 0.0
    %91 = vmatprep.subr.mxu0 0.0
    %92 = vmatpush1.msra.mxu0 0.0
    %93 = vmatprep.subr.mxu0 0.0
    %94 = vmatpush1.msra.mxu0 0.0
    %95 = vmatprep.subr.mxu0 0.0
    %96 = vmatpush1.msra.mxu0 0.0
    %97 = vmatprep.subr.mxu0 0.0
    %98 = vmatpush1.msra.mxu0 0.0
    %99 = vmatprep.subr.mxu0 0.0
    %100 = vmatpush1.msra.mxu0 0.0
    %101 = vmatprep.subr.mxu0 0.0
    %102 = vmatpush1.msra.mxu0 0.0
    %103 = vmatprep.subr.mxu0 0.0
    %104 = vmatpush1.msra.mxu0 0.0
    %105 = vmatprep.subr.mxu0 0.0
    %106 = vmatpush1.msra.mxu0 0.0
    %107 = vmatprep.mubr.f32.mxu0 0.0
    %108 = vmatmul.mubr.f32.gmra.mrb[0].mxu0 %v41
    %v109 = vpop.f32.mrb[0].mxu0
    %v110 = vadd.f32 %v37, %v109
    %v111 = vpop.f32.mrb[0].mxu0
    %112 = vdwg.mxu0
    %v113 = vmax.f32 %v110, 0.0
    %v114 = vld [vmem:[%s3] sm:$0xff]
    %v115 = vld [vmem:[%s3 + $0x8] sm:$0xff]
    %v116 = vld [vmem:[%s3 + $0x10] sm:$0xff]
    %v117 = vld [vmem:[%s3 + $0x18] sm:$0xff]
    %v118 = vld [vmem:[%s3 + $0x20] sm:$0xff]
    %v119 = vld [vmem:[%s3 + $0x28] sm:$0xff]
    %v120 = vld [vmem:[%s3 + $0x30] sm:$0xff]
    %v121 = vld [vmem:[%s3 + $0x38] sm:$0xff]
    %v122 = vld [vmem:[%s4] sm:$0x1]
    %v124 = vlaneseq
    %v125 = vshrl.u32 %v124, 7
    %v126 = vsub.s32 0, %v125
    %v127 = vrot.slane %v122, %v126
    %vm129 = vcmask 523264
    %v131 = vsel %vm129, %v113, 0
    %133 = vmatprep.subr.mxu0 0.0
    %134 = vmatpush1.msra.mxu0 %v114
    %135 = vmatprep.subr.mxu0 0.0
    %136 = vmatpush1.msra.mxu0 %v115
    %137 = vmatprep.subr.mxu0 0.0
    %138 = vmatpush1.msra.mxu0 %v116
    %139 = vmatprep.subr.mxu0 0.0
    %140 = vmatpush1.msra.mxu0 %v117
    %141 = vmatprep.subr.mxu0 0.0
    %142 = vmatpush1.msra.mxu0 %v118
    %143 = vmatprep.subr.mxu0 0.0
    %144 = vmatpush1.msra.mxu0 %v119
    %145 = vmatprep.subr.mxu0 0.0
    %146 = vmatpush1.msra.mxu0 %v120
    %147 = vmatprep.subr.mxu0 0.0
    %148 = vmatpush1.msra.mxu0 %v121
    %149 = vmatprep.subr.mxu0 0.0
    %150 = vmatpush1.msra.mxu0 0.0
    %151 = vmatprep.subr.mxu0 0.0
    %152 = vmatpush1.msra.mxu0 0.0
    %153 = vmatprep.subr.mxu0 0.0
    %154 = vmatpush1.msra.mxu0 0.0
    %155 = vmatprep.subr.mxu0 0.0
    %156 = vmatpush1.msra.mxu0 0.0
    %157 = vmatprep.subr.mxu0 0.0
    %158 = vmatpush1.msra.mxu0 0.0
    %159 = vmatprep.subr.mxu0 0.0
    %160 = vmatpush1.msra.mxu0 0.0
    %161 = vmatprep.subr.mxu0 0.0
    %162 = vmatpush1.msra.mxu0 0.0
    %163 = vmatprep.subr.mxu0 0.0
    %164 = vmatpush1.msra.mxu0 0.0
    %165 = vmatprep.subr.mxu0 0.0
    %166 = vmatpush1.msra.mxu0 0.0
    %167 = vmatprep.subr.mxu0 0.0
    %168 = vmatpush1.msra.mxu0 0.0
    %169 = vmatprep.subr.mxu0 0.0
    %170 = vmatpush1.msra.mxu0 0.0
    %171 = vmatprep.subr.mxu0 0.0
    %172 = vmatpush1.msra.mxu0 0.0
    %173 = vmatprep.subr.mxu0 0.0
    %174 = vmatpush1.msra.mxu0 0.0
    %175 = vmatprep.subr.mxu0 0.0
    %176 = vmatpush1.msra.mxu0 0.0
    %177 = vmatprep.subr.mxu0 0.0
    %178 = vmatpush1.msra.mxu0 0.0
    %179 = vmatprep.subr.mxu0 0.0
    %180 = vmatpush1.msra.mxu0 0.0
    %181 = vmatprep.subr.mxu0 0.0
    %182 = vmatpush1.msra.mxu0 0.0
    %183 = vmatprep.subr.mxu0 0.0
    %184 = vmatpush1.msra.mxu0 0.0
    %185 = vmatprep.subr.mxu0 0.0
    %186 = vmatpush1.msra.mxu0 0.0
    %187 = vmatprep.subr.mxu0 0.0
    %188 = vmatpush1.msra.mxu0 0.0
    %189 = vmatprep.subr.mxu0 0.0
    %190 = vmatpush1.msra.mxu0 0.0
    %191 = vmatprep.subr.mxu0 0.0
    %192 = vmatpush1.msra.mxu0 0.0
    %193 = vmatprep.subr.mxu0 0.0
    %194 = vmatpush1.msra.mxu0 0.0
    %195 = vmatprep.subr.mxu0 0.0
    %196 = vmatpush1.msra.mxu0 0.0
    %197 = vmatprep.mubr.f32.mxu0 0.0
    %198 = vmatmul.mubr.f32.gmra.mrb[0].mxu0 %v131
    %v199 = vpop.f32.mrb[0].mxu0
    %v200 = vadd.f32 %v127, %v199
    %v201 = vpop.f32.mrb[0].mxu0
    %202 = vdwg.mxu0
    %v203 = vmax.f32 %v200, 0.0
    %v204 = vld [vmem:[%s5] sm:$0xff]
    %v205 = vld [vmem:[%s5 + $0x8] sm:$0xff]
    %v206 = vld [vmem:[%s5 + $0x10] sm:$0xff]
    %v207 = vld [vmem:[%s5 + $0x18] sm:$0xff]
    %v208 = vld [vmem:[%s6] sm:$0x1]
    %v210 = vlaneseq
    %v211 = vshrl.u32 %v210, 7
    %v212 = vsub.s32 0, %v211
    %v213 = vrot.slane %v208, %v212
    %v216 = vsel %vm39, %v203, 0
    %218 = vmatprep.subr.mxu0 0.0
    %219 = vmatpush1.msra.mxu0 %v204
    %220 = vmatprep.subr.mxu0 0.0
    %221 = vmatpush1.msra.mxu0 %v205
    %222 = vmatprep.subr.mxu0 0.0
    %223 = vmatpush1.msra.mxu0 %v206
    %224 = vmatprep.subr.mxu0 0.0
    %225 = vmatpush1.msra.mxu0 %v207
    %226 = vmatprep.subr.mxu0 0.0
    %227 = vmatpush1.msra.mxu0 0.0
    %228 = vmatprep.subr.mxu0 0.0
    %229 = vmatpush1.msra.mxu0 0.0
    %230 = vmatprep.subr.mxu0 0.0
    %231 = vmatpush1.msra.mxu0 0.0
    %232 = vmatprep.subr.mxu0 0.0
    %233 = vmatpush1.msra.mxu0 0.0
    %234 = vmatprep.subr.mxu0 0.0
    %235 = vmatpush1.msra.mxu0 0.0
    %236 = vmatprep.subr.mxu0 0.0
    %237 = vmatpush1.msra.mxu0 0.0
    %238 = vmatprep.subr.mxu0 0.0
    %239 = vmatpush1.msra.mxu0 0.0
    %240 = vmatprep.subr.mxu0 0.0
    %241 = vmatpush1.msra.mxu0 0.0
    %242 = vmatprep.subr.mxu0 0.0
    %243 = vmatpush1.msra.mxu0 0.0
    %244 = vmatprep.subr.mxu0 0.0
    %245 = vmatpush1.msra.mxu0 0.0
    %246 = vmatprep.subr.mxu0 0.0
    %247 = vmatpush1.msra.mxu0 0.0
    %248 = vmatprep.subr.mxu0 0.0
    %249 = vmatpush1.msra.mxu0 0.0
    %250 = vmatprep.subr.mxu0 0.0
    %251 = vmatpush1.msra.mxu0 0.0
    %252 = vmatprep.subr.mxu0 0.0
    %253 = vmatpush1.msra.mxu0 0.0
    %254 = vmatprep.subr.mxu0 0.0
    %255 = vmatpush1.msra.mxu0 0.0
    %256 = vmatprep.subr.mxu0 0.0
    %257 = vmatpush1.msra.mxu0 0.0
    %258 = vmatprep.subr.mxu0 0.0
    %259 = vmatpush1.msra.mxu0 0.0
    %260 = vmatprep.subr.mxu0 0.0
    %261 = vmatpush1.msra.mxu0 0.0
    %262 = vmatprep.subr.mxu0 0.0
    %263 = vmatpush1.msra.mxu0 0.0
    %264 = vmatprep.subr.mxu0 0.0
    %265 = vmatpush1.msra.mxu0 0.0
    %266 = vmatprep.subr.mxu0 0.0
    %267 = vmatpush1.msra.mxu0 0.0
    %268 = vmatprep.subr.mxu0 0.0
    %269 = vmatpush1.msra.mxu0 0.0
    %270 = vmatprep.subr.mxu0 0.0
    %271 = vmatpush1.msra.mxu0 0.0
    %272 = vmatprep.subr.mxu0 0.0
    %273 = vmatpush1.msra.mxu0 0.0
    %274 = vmatprep.subr.mxu0 0.0
    %275 = vmatpush1.msra.mxu0 0.0
    %276 = vmatprep.subr.mxu0 0.0
    %277 = vmatpush1.msra.mxu0 0.0
    %278 = vmatprep.subr.mxu0 0.0
    %279 = vmatpush1.msra.mxu0 0.0
    %280 = vmatprep.subr.mxu0 0.0
    %281 = vmatpush1.msra.mxu0 0.0
    %282 = vmatprep.mubr.f32.mxu0 0.0
    %283 = vmatmul.mubr.f32.gmra.mrb[0].mxu0 %v216
    %v284 = vpop.f32.mrb[0].mxu0
    %v285 = vadd.f32 %v213, %v284
    %v286 = vpop.f32.mrb[0].mxu0
    %287 = vdwg.mxu0
    %288 = vst [vmem:[#allocation2] sm:$0xff] %v285
    // Predicated region
    $region30: #{tpu_custom_call.1} parent=1 // pred_check
      _
    $region31: #{tpu_custom_call.1} parent=1 // pred_check_branch
      %290 = sbr.rel (0) target = $region33
    $region32: #{tpu_custom_call.1} parent=1 // pred_region
      %s292 = ssub.s32 128, 128
      %293 = vsyncadd [#allocation3], %s292
      %s295 = sshll.u32 [#allocation2], 4
      %s296 = int_to_ptr.vmem [resolvable:$true] %s295
      %298 = dma.vmem_to_hbm [thread:$0]  %s296, 128, %s7, [#allocation3]
    $region33: #{tpu_custom_call.1} parent=1 // pred_fallthru
      _
    // Predicated region
    $region34: #{tpu_custom_call.1} parent=1 // pred_check
      _
    $region35: #{tpu_custom_call.1} parent=1 // pred_check_branch
      %300 = sbr.rel (0) target = $region37
    $region36: #{tpu_custom_call.1} parent=1 // pred_region
      %301 = dma.done [#allocation3], 128
    $region37: #{tpu_custom_call.1} parent=1 // pred_fallthru
      _
    %302 = vsyncpa [#allocation3], 1

</llo_original>
